<compile_context>
chip_gen: v7x
topology: tpu7x:2x2x1
jax: 0.10.0
libtpu: 0.0.40
codegen_flags: <defaults>
</compile_context>

<pallas_src>
import jax
import jax.numpy as jnp
from jax.experimental import pallas as pl
from jax.experimental.pallas import tpu as pltpu


# ----------------------------------------------------------------------------
# Copy path A (default for explicit copies): direct HBM -> HBM DMA.
# ----------------------------------------------------------------------------
def _dma_copy_kernel(x_hbm_ref, o_hbm_ref, sem):
    # Single DMA: no VMEM staging, no vld/vst body, no per-tile grid machinery.
    cp = pltpu.make_async_copy(x_hbm_ref, o_hbm_ref, sem)
    cp.start()
    cp.wait()


def _identity_copy_dma(x: jax.Array) -> jax.Array:
    return pl.pallas_call(
        _dma_copy_kernel,
        out_shape=jax.ShapeDtypeStruct(x.shape, x.dtype),
        in_specs=[pl.BlockSpec(memory_space=pl.ANY)],
        out_specs=pl.BlockSpec(memory_space=pl.ANY),
        scratch_shapes=[pltpu.SemaphoreType.DMA(())],
    )(x)


# ----------------------------------------------------------------------------
# Copy path B (optional): VMEM-staged, lane-dense, large-tile copy.
# ----------------------------------------------------------------------------
def _tiled_copy_kernel(x_ref, o_ref):
    # Pure elementwise copy of the current tile (VMEM load -> VMEM store).
    o_ref[...] = x_ref[...]


_LANE_WIDTHS = (8192, 4096, 2048, 1024, 512, 256, 128)


def _choose_2d_shape(total: int):
    """Widest lane-dense (R, L) factorization of `total` (unmasked vst)."""
    for lw in _LANE_WIDTHS:
        if total % lw == 0:
            return total // lw, lw
    return None


def _vmem_capacity_bytes() -> int:
    try:
        return int(pltpu.get_tpu_info().vmem_capacity_bytes)
    except Exception:
        return 64 << 20  # conservative default: v7x-sized VMEM


def _choose_tile_rows(n_rows: int, lane_width: int, itemsize: int,
                      vmem_capacity: int) -> int:
    """Pick a row-tile: ~8 MiB blocks (16 MiB on 128 MiB-VMEM parts), while
    keeping >=4 grid steps when the row extent allows so the "parallel" axis
    can shard across v7x's two TensorCores."""
    target_bytes = (16 << 20) if vmem_capacity >= (96 << 20) else (8 << 20)
    row_bytes = lane_width * itemsize
    max_rows = max(1, target_bytes // row_bytes)
    min_steps = 4
    if n_rows >= min_steps * 32:          # enough rows to split: force >=4 steps
        max_rows = min(max_rows, max(32, n_rows // min_steps))
    if n_rows <= max_rows:
        return n_rows                     # single block covers full row extent
    # Multiple of 32 rows covers sublane packing for f32 / bf16 / int8.
    return max(32, (max_rows // 32) * 32)


def _identity_copy_tiled(x2d: jax.Array) -> jax.Array:
    R, L = x2d.shape
    itemsize = jnp.dtype(x2d.dtype).itemsize
    vmem_cap = _vmem_capacity_bytes()
    tile_rows = _choose_tile_rows(R, L, itemsize, vmem_cap)
    tile_bytes = tile_rows * L * itemsize
    # Default double-buffering: 2 operands x 2 buffers ~= 4x tile bytes; budget
    # 6x with a 32 MiB floor, never more than ~3/4 of physical VMEM
    # (=> ~96 MiB on v5e/v6e 128 MiB parts, ~48 MiB on v7x 64 MiB parts).
    vmem_limit = int(min((vmem_cap * 3) // 4, max(32 << 20, 6 * tile_bytes)))
    return pl.pallas_call(
        _tiled_copy_kernel,
        out_shape=jax.ShapeDtypeStruct((R, L), x2d.dtype),
        grid_spec=pltpu.PrefetchScalarGridSpec(
            num_scalar_prefetch=0,
            grid=(pl.cdiv(R, tile_rows),),
            in_specs=[pl.BlockSpec((tile_rows, L), lambda i: (i, 0))],
            out_specs=pl.BlockSpec((tile_rows, L), lambda i: (i, 0)),
        ),
        compiler_params=pltpu.CompilerParams(
            dimension_semantics=("parallel",),
            vmem_limit_bytes=vmem_limit,
        ),
    )(x2d)


# ----------------------------------------------------------------------------
# Public copy helper
# ----------------------------------------------------------------------------
def identity_copy(x: jax.Array, *, donate: bool = False,
                  via_vmem: bool = False) -> jax.Array:
    """Identity with an explicit output buffer policy.

    donate=True : caller gives up x -> returning x is the zero-HBM-traffic
                  aliasing the perf review asks for (XLA aliases in->out under
                  jit donation); no kernel launch.
    via_vmem    : stage through VMEM tiles (fusion template); falls back to the
                  DMA copy for shapes that don't factor into lane-dense tiles,
                  so a distinct buffer is always produced.
    default     : single HBM->HBM DMA copy (distinct buffer, HBM-saturating).
    """
    if donate:
        return x
    if x.size == 0:
        return jnp.copy(x)  # degenerate but still a distinct buffer
    if via_vmem:
        shape2d = _choose_2d_shape(x.size)
        if shape2d is not None:
            R, Lw = shape2d
            # NOTE: reshape is free only for contiguous row-major x; the DMA
            # path below avoids reshapes entirely (works on the native shape).
            return _identity_copy_tiled(x.reshape(R, Lw)).reshape(x.shape)
        # fall through: DMA copy still gives a distinct buffer (contract kept)
    return _identity_copy_dma(x)


# ----------------------------------------------------------------------------
# Module port
# ----------------------------------------------------------------------------
class IdentityFirstStage:
    """JAX port of ldm's IdentityFirstStage (no parameters).

    Default behavior is a true no-op (returns x directly — no HBM traffic).
    copy_through_kernel=True routes through the Pallas copy kernels above.
    """

    def __init__(self, *args, vq_interface: bool = False,
                 copy_through_kernel: bool = False,
                 donate: bool = False,
                 copy_via_vmem: bool = False, **kwargs):
        self.vq_interface = vq_interface
        self.copy_through_kernel = copy_through_kernel
        self.donate = donate
        self.copy_via_vmem = copy_via_vmem

    def _run(self, x: jax.Array) -> jax.Array:
        if self.copy_through_kernel:
            return identity_copy(x, donate=self.donate,
                                 via_vmem=self.copy_via_vmem)
        return x  # identity: zero-cost, no kernel launch

    def encode(self, x, *args, **kwargs):
        return self._run(x)

    def decode(self, x, *args, **kwargs):
        return self._run(x)

    def quantize(self, x, *args, **kwargs):
        if self.vq_interface:
            return (self._run(x), None, [None, None, None])
        return self._run(x)

    def forward(self, x, *args, **kwargs):
        return self._run(x)

    __call__ = forward


if __name__ == "__main__":
    key = jax.random.PRNGKey(0)
    # NCHW input, consistent with a first-stage autoencoder interface.
    x = jax.random.normal(key, (2, 4, 16, 16), dtype=jnp.float32)

    # 1) Default (recommended) path: pure identity, no kernel launch.
    model = IdentityFirstStage(vq_interface=False)
    y = jax.block_until_ready(model(x))
    assert y.shape == x.shape and y.dtype == x.dtype
    assert bool(jnp.all(y == x))

    # 2) Explicit-copy path: direct HBM->HBM DMA Pallas kernel.
    model_copy = IdentityFirstStage(vq_interface=True, copy_through_kernel=True)
    yc = jax.block_until_ready(model_copy(x))
    assert yc.shape == x.shape and yc.dtype == x.dtype
    assert bool(jnp.all(yc == x))

    # vq_interface quantize tuple shape check (goes through the DMA kernel).
    q, _, extras = model_copy.quantize(x)
    q = jax.block_until_ready(q)
    assert bool(jnp.all(q == x)) and len(extras) == 3

    # 3) VMEM-staged tiled copy path (fusion template), exercised once.
    yt = jax.block_until_ready(identity_copy(x, via_vmem=True))
    assert yt.shape == x.shape and yt.dtype == x.dtype
    assert bool(jnp.all(yt == x))

    # 4) Donated-input path: output aliases the (dead) input, zero HBM traffic.
    yd = jax.block_until_ready(identity_copy(x, donate=True))
    assert bool(jnp.all(yd == x))

    print("KERNEL_OK")
</pallas_src>

<mosaic_0001>
module attributes {stable_mosaic.version = 11 : i64} {
  func.func @_dma_copy_kernel(%arg0: memref<2x4x16x16xf32, #tpu.memory_space<any>>, %arg1: memref<2x4x16x16xf32, #tpu.memory_space<any>>, %arg2: memref<!tpu.dma_semaphore, #tpu.memory_space<semaphore_mem>>) attributes {dimension_semantics = [], scalar_prefetch = 0 : i64, scratch_operands = 1 : i64, tpu.core_type = #tpu.core_type<tc>} {
    tpu.enqueue_dma source(%arg0 : memref<2x4x16x16xf32, #tpu.memory_space<any>>) target(%arg1 : memref<2x4x16x16xf32, #tpu.memory_space<any>>) target_semaphore(%arg2 : memref<!tpu.dma_semaphore, #tpu.memory_space<semaphore_mem>>)
    tpu.wait_dma2 semaphore(%arg2 : memref<!tpu.dma_semaphore, #tpu.memory_space<semaphore_mem>>) src(%arg0 : memref<2x4x16x16xf32, #tpu.memory_space<any>>) dst(%arg1 : memref<2x4x16x16xf32, #tpu.memory_space<any>>)
    return
  }
}

</mosaic_0001>

<llo_original>
// kernel: tpu_custom_call.1
$region0: #{tpu_custom_call.1}
  #allocation0 [shape = 'u32[]', space=smem, size = 0x4, offset = 0x4, fixed_abs, tag = 'smem constant byte address 0x4 - core index']
  #allocation1 [shape = 'u32[144,128]{1,0:T(1,128)}', space=vmem, size = 0x12000, scoped, tag = 'internal scratch']
  #allocation2 [shape = 's32[1]{0}', space=sflag, size = 0x4, scoped, tag = 'scratch operand']
  #allocation3 [shape = 's32[]', space=sflag, size = 0x4, offset = 0, fixed_abs, tag = 'sflag constant byte address 0x0 - dummy sync flag']
  #allocation4 [shape = 'u32[0]{0}', space=smem, size = 0, offset = 0, fixed_abs, tag = 'smem constant byte address 0x0 - null']
  %s0 = inlined_call_operand.hbm [shape: f32[2,4,16,16], index: 0, kind: input, shape index: {}]
  %s1 = inlined_call_operand.hbm [shape: f32[2,4,16,16], index: 1, kind: output, shape index: {}]
  %s2 = sld [smem:[#allocation0]]
  $region2: #{tpu_custom_call.1} parent=0
    _
  %s4 = ssub.s32 1, %s2
  %s5 = scalar_select 0, %s4, %s2
  %s7 = sshll.u32 1, 14
  %s8 = sxor.u32 4294967295, %s7
  %s11 = sshll.u32 3, 24
  %s12 = sxor.u32 4294967295, %s11
  %s13 = sand.u32 0, %s12
  %s15 = sor.u32 %s13, 0
  %18 = dma.general %s0, 2048, %s1, [#allocation2], [#allocation3], [#allocation4], %s15, 0
  %s19 = smul.u32 2, 4
  %s20 = smul.u32 %s19, 16
  %s21 = smul.u32 %s20, 1
  %s22 = sshll.u32 %s21, 4
  %23 = dma.done [#allocation2], %s22
  %24 = vsyncmov [#allocation2]
  %s25 = vpop.sfrf %24
  %p26 = scmp.eq.s32.totalorder %s25, 0
  %p27 = pneg %p26
  %29 = shalt.err (%p27)

</llo_original>
